<compile_context>
chip_gen: v6e
topology: v6e:2x2x1
jax: 0.10.0
libtpu: 0.0.40
codegen_flags: <defaults>
</compile_context>

<pallas_src>
import jax
import jax.numpy as jnp
from jax.experimental import pallas as pl
from jax.experimental.pallas import tpu as pltpu


_NEG_LARGE = -1e30      # bias for padded class lanes -> exp() == 0
_TB_MAX = 512           # batch-tile rows (f32 out tile 512x128 = 256 KiB)


def _round_up(n, m):
    return ((n + m - 1) // m) * m


def meta_learner_kernel(x_ref, w1_ref, b1_ref, w2_ref, b2_ref, o_ref):
    # x_ref : [M, TB, C]   native module-major input tile
    # w1_ref: [M, C, MCP]  layer-0 weight, per-module K-slices, lane-padded
    # b1_ref: [1, MCP]     f32, zero-padded
    # w2_ref: [MCP, CP]    layer-1 weight, zero-padded rows/cols
    # b2_ref: [1, CP]      f32, padded lanes = -1e30
    # o_ref : [TB, CP]     f32 probabilities (padded lanes ~ 0)
    num_modules = x_ref.shape[0]

    # Layer 0: Linear(M*C -> M*C); the PyTorch permute(1,0,2)+reshape is folded
    # in as an accumulation over per-module K-slices (unrolled, M is tiny).
    h = jnp.dot(x_ref[0], w1_ref[0], preferred_element_type=jnp.float32)
    for m in range(1, num_modules):
        h = h + jnp.dot(x_ref[m], w1_ref[m],
                        preferred_element_type=jnp.float32)
    h = jnp.maximum(h + b1_ref[...], 0.0)                      # bias + ReLU

    # Layer 1: Linear(M*C -> C) into a lane-dense, CP-wide logit slab.
    logits = jnp.dot(h.astype(w2_ref.dtype), w2_ref[...],
                     preferred_element_type=jnp.float32)
    logits = logits + b2_ref[...]          # padded lanes carry -1e30

    # Numerically-stable softmax over the class lane axis (padded lanes -> 0).
    m_max = jnp.max(logits, axis=-1, keepdims=True)
    e = jnp.exp(logits - m_max)
    denom = jnp.sum(e, axis=-1, keepdims=True)
    o_ref[...] = (e * pl.reciprocal(denom, approx=True)).astype(o_ref.dtype)


def meta_learner_forward(x, w1, b1, w2, b2, *, num_modules, num_classes,
                         softmax=True, compute_dtype=jnp.bfloat16,
                         batch_tile=_TB_MAX):
    """x: [num_modules, batch, num_classes] (PyTorch convention).

    w1: [M*C, M*C], w2: [M*C, C] stored pre-transposed as (in, out)."""
    assert softmax, "kernel implements the softmax=True path"
    M, B, C = x.shape
    assert M == num_modules and C == num_classes
    MC = M * C
    MCP = _round_up(MC, 128)        # lane-padded hidden width
    CP = _round_up(C, 128)          # lane-padded class width

    # ---- trace-time weight packing (zero cost at runtime under jit) -------
    w1_p = jnp.pad(w1.reshape(M, C, MC), ((0, 0), (0, 0), (0, MCP - MC)))
    b1_p = jnp.pad(b1.reshape(1, MC), ((0, 0), (0, MCP - MC)))
    w2_p = jnp.pad(w2, ((0, MCP - MC), (0, CP - C)))
    b2_p = jnp.pad(b2.reshape(1, C), ((0, 0), (0, CP - C)),
                   constant_values=_NEG_LARGE)

    # ---- batch tiling ------------------------------------------------------
    if B <= batch_tile:
        TB, Bp = B, B                       # single tile, full-dim block legal
    else:
        TB = _round_up(batch_tile, 8)       # (8,128) sublane rule
        Bp = _round_up(B, TB)
    if Bp != B:
        x = jnp.pad(x, ((0, 0), (0, Bp - B), (0, 0)))
    grid = (Bp // TB,)

    x_c = x.astype(compute_dtype)
    w1_c = w1_p.astype(compute_dtype)
    w2_c = w2_p.astype(compute_dtype)
    b1_c = b1_p.astype(jnp.float32)
    b2_c = b2_p.astype(jnp.float32)

    cost = pl.CostEstimate(
        flops=2 * Bp * (M * C * MCP + MCP * CP),
        transcendentals=Bp * CP,
        bytes_accessed=(x_c.size * x_c.dtype.itemsize
                        + w1_c.size * w1_c.dtype.itemsize
                        + w2_c.size * w2_c.dtype.itemsize
                        + (b1_c.size + b2_c.size) * 4
                        + Bp * CP * 4))

    out_padded = pl.pallas_call(
        meta_learner_kernel,
        out_shape=jax.ShapeDtypeStruct((Bp, CP), jnp.float32),
        grid_spec=pltpu.PrefetchScalarGridSpec(
            num_scalar_prefetch=0,
            grid=grid,
            in_specs=[
                pl.BlockSpec((M, TB, C), lambda i: (0, i, 0)),     # x tile
                pl.BlockSpec((M, C, MCP), lambda i: (0, 0, 0)),    # w1 (resident)
                pl.BlockSpec((1, MCP), lambda i: (0, 0)),          # b1 (resident)
                pl.BlockSpec((MCP, CP), lambda i: (0, 0)),         # w2 (resident)
                pl.BlockSpec((1, CP), lambda i: (0, 0)),           # b2 (resident)
            ],
            out_specs=pl.BlockSpec((TB, CP), lambda i: (i, 0)),
        ),
        compiler_params=pltpu.CompilerParams(
            dimension_semantics=("parallel",),
            vmem_limit_bytes=32 * 1024 * 1024),   # safe on v7x's 64 MiB VMEM
        cost_estimate=cost,
    )(x_c, w1_c, b1_c, w2_c, b2_c)

    return out_padded[:B, :C]


def _reference_forward(x, w1, b1, w2, b2, num_modules, num_classes):
    b = x.shape[1]
    x2d = jnp.transpose(x, (1, 0, 2)).reshape(b, num_modules * num_classes)
    h = jnp.maximum(x2d @ w1 + b1, 0.0)
    logits = h @ w2 + b2
    return jax.nn.softmax(logits, axis=-1)


if __name__ == "__main__":
    num_classes = 8
    num_modules = 4
    mc = num_modules * num_classes

    key = jax.random.PRNGKey(0)
    k_x, k_w1, k_w2, k_b2, k_x2 = jax.random.split(key, 5)

    # Parameters (PyTorch-Linear-style uniform init), pre-transposed (in, out).
    bound1 = 1.0 / float(mc) ** 0.5
    w1 = jax.random.uniform(k_w1, (mc, mc), jnp.float32, -bound1, bound1)
    b1 = jnp.zeros((mc,), jnp.float32)            # nn.init.zeros_ on layers[:-1]
    w2 = jax.random.uniform(k_w2, (mc, num_classes), jnp.float32, -bound1, bound1)
    b2 = jax.random.uniform(k_b2, (num_classes,), jnp.float32, -bound1, bound1)

    # --- small demo batch, f32 MXU operands (structural correctness) -------
    batch = 2
    x = jax.random.normal(k_x, (num_modules, batch, num_classes), jnp.float32)
    out = meta_learner_forward(x, w1, b1, w2, b2,
                               num_modules=num_modules,
                               num_classes=num_classes,
                               softmax=True,
                               compute_dtype=jnp.float32)
    out = jax.block_until_ready(out)
    ref = _reference_forward(x, w1, b1, w2, b2, num_modules, num_classes)
    assert out.shape == (batch, num_classes)
    assert jnp.allclose(out, ref, atol=5e-3, rtol=5e-3)   # approx reciprocal
    assert jnp.allclose(jnp.sum(out, axis=-1), 1.0, atol=5e-3)

    # --- larger batch exercising the pipelined grid + bf16 MXU operands ----
    batch2 = 600      # > 512-row tile and not a multiple of it -> pad path
    x2 = jax.random.normal(k_x2, (num_modules, batch2, num_classes), jnp.float32)
    out2 = meta_learner_forward(x2, w1, b1, w2, b2,
                                num_modules=num_modules,
                                num_classes=num_classes,
                                softmax=True,
                                compute_dtype=jnp.bfloat16)
    out2 = jax.block_until_ready(out2)
    ref2 = _reference_forward(x2, w1, b1, w2, b2, num_modules, num_classes)
    assert out2.shape == (batch2, num_classes)
    assert jnp.allclose(out2, ref2, atol=3e-2, rtol=3e-2)  # bf16 operands
    assert jnp.allclose(jnp.sum(out2, axis=-1), 1.0, atol=5e-3)

    print("KERNEL_OK")
</pallas_src>

<mosaic_0001>
module attributes {stable_mosaic.version = 11 : i64} {
  func.func @meta_learner_kernel(%arg0: i32, %arg1: memref<4x2x8xf32, #tpu.memory_space<vmem>>, %arg2: memref<4x8x128xf32, #tpu.memory_space<vmem>>, %arg3: memref<1x128xf32, #tpu.memory_space<vmem>>, %arg4: memref<128x128xf32, #tpu.memory_space<vmem>>, %arg5: memref<1x128xf32, #tpu.memory_space<vmem>>, %arg6: memref<2x128xf32, #tpu.memory_space<vmem>>) attributes {dimension_semantics = [#tpu.dimension_semantics<parallel>], iteration_bounds = array<i64: 1>, scalar_prefetch = 0 : i64, scratch_operands = 0 : i64, tpu.core_type = #tpu.core_type<tc>, window_params = [{transform_indices = @transform_0, window_bounds = array<i64: 4, 2, 8>}, {pipeline_mode = #tpu.pipeline_mode<synchronous>, transform_indices = @transform_1, window_bounds = array<i64: 4, 8, 128>}, {pipeline_mode = #tpu.pipeline_mode<synchronous>, transform_indices = @transform_2, window_bounds = array<i64: 1, 128>}, {pipeline_mode = #tpu.pipeline_mode<synchronous>, transform_indices = @transform_3, window_bounds = array<i64: 128, 128>}, {pipeline_mode = #tpu.pipeline_mode<synchronous>, transform_indices = @transform_4, window_bounds = array<i64: 1, 128>}, {transform_indices = @transform_5, window_bounds = array<i64: 2, 128>}]} {
    %c0 = arith.constant 0 : index
    %c0_0 = arith.constant 0 : index
    %c0_1 = arith.constant 0 : index
    %0 = vector.load %arg1[%c0, %c0_0, %c0_1] : memref<4x2x8xf32, #tpu.memory_space<vmem>>, vector<1x2x8xf32>
    %1 = vector.shape_cast %0 : vector<1x2x8xf32> to vector<2x8xf32>
    %c0_2 = arith.constant 0 : index
    %c0_3 = arith.constant 0 : index
    %c0_4 = arith.constant 0 : index
    %2 = vector.load %arg2[%c0_2, %c0_3, %c0_4] : memref<4x8x128xf32, #tpu.memory_space<vmem>>, vector<1x8x128xf32>
    %3 = vector.shape_cast %2 : vector<1x8x128xf32> to vector<8x128xf32>
    %cst = arith.constant dense<0.000000e+00> : vector<2x128xf32>
    %4 = tpu.matmul %1, %3, %cst {dimension_numbers = #tpu.dot_dimension_numbers<[1], [0], [0], [1], [0, 0, 1, 1], [], []>} : vector<2x8xf32>, vector<8x128xf32>, vector<2x128xf32> -> vector<2x128xf32>
    %c1 = arith.constant 1 : index
    %c0_5 = arith.constant 0 : index
    %c0_6 = arith.constant 0 : index
    %5 = vector.load %arg1[%c1, %c0_5, %c0_6] : memref<4x2x8xf32, #tpu.memory_space<vmem>>, vector<1x2x8xf32>
    %6 = vector.shape_cast %5 : vector<1x2x8xf32> to vector<2x8xf32>
    %c1_7 = arith.constant 1 : index
    %c0_8 = arith.constant 0 : index
    %c0_9 = arith.constant 0 : index
    %7 = vector.load %arg2[%c1_7, %c0_8, %c0_9] : memref<4x8x128xf32, #tpu.memory_space<vmem>>, vector<1x8x128xf32>
    %8 = vector.shape_cast %7 : vector<1x8x128xf32> to vector<8x128xf32>
    %cst_10 = arith.constant dense<0.000000e+00> : vector<2x128xf32>
    %9 = tpu.matmul %6, %8, %cst_10 {dimension_numbers = #tpu.dot_dimension_numbers<[1], [0], [0], [1], [0, 0, 1, 1], [], []>} : vector<2x8xf32>, vector<8x128xf32>, vector<2x128xf32> -> vector<2x128xf32>
    %10 = arith.addf %4, %9 : vector<2x128xf32>
    %c2 = arith.constant 2 : index
    %c0_11 = arith.constant 0 : index
    %c0_12 = arith.constant 0 : index
    %11 = vector.load %arg1[%c2, %c0_11, %c0_12] : memref<4x2x8xf32, #tpu.memory_space<vmem>>, vector<1x2x8xf32>
    %12 = vector.shape_cast %11 : vector<1x2x8xf32> to vector<2x8xf32>
    %c2_13 = arith.constant 2 : index
    %c0_14 = arith.constant 0 : index
    %c0_15 = arith.constant 0 : index
    %13 = vector.load %arg2[%c2_13, %c0_14, %c0_15] : memref<4x8x128xf32, #tpu.memory_space<vmem>>, vector<1x8x128xf32>
    %14 = vector.shape_cast %13 : vector<1x8x128xf32> to vector<8x128xf32>
    %cst_16 = arith.constant dense<0.000000e+00> : vector<2x128xf32>
    %15 = tpu.matmul %12, %14, %cst_16 {dimension_numbers = #tpu.dot_dimension_numbers<[1], [0], [0], [1], [0, 0, 1, 1], [], []>} : vector<2x8xf32>, vector<8x128xf32>, vector<2x128xf32> -> vector<2x128xf32>
    %16 = arith.addf %10, %15 : vector<2x128xf32>
    %c3 = arith.constant 3 : index
    %c0_17 = arith.constant 0 : index
    %c0_18 = arith.constant 0 : index
    %17 = vector.load %arg1[%c3, %c0_17, %c0_18] : memref<4x2x8xf32, #tpu.memory_space<vmem>>, vector<1x2x8xf32>
    %18 = vector.shape_cast %17 : vector<1x2x8xf32> to vector<2x8xf32>
    %c3_19 = arith.constant 3 : index
    %c0_20 = arith.constant 0 : index
    %c0_21 = arith.constant 0 : index
    %19 = vector.load %arg2[%c3_19, %c0_20, %c0_21] : memref<4x8x128xf32, #tpu.memory_space<vmem>>, vector<1x8x128xf32>
    %20 = vector.shape_cast %19 : vector<1x8x128xf32> to vector<8x128xf32>
    %cst_22 = arith.constant dense<0.000000e+00> : vector<2x128xf32>
    %21 = tpu.matmul %18, %20, %cst_22 {dimension_numbers = #tpu.dot_dimension_numbers<[1], [0], [0], [1], [0, 0, 1, 1], [], []>} : vector<2x8xf32>, vector<8x128xf32>, vector<2x128xf32> -> vector<2x128xf32>
    %22 = arith.addf %16, %21 : vector<2x128xf32>
    %c0_23 = arith.constant 0 : index
    %c0_24 = arith.constant 0 : index
    %23 = vector.load %arg3[%c0_23, %c0_24] : memref<1x128xf32, #tpu.memory_space<vmem>>, vector<1x128xf32>
    %24 = vector.broadcast %23 : vector<1x128xf32> to vector<2x128xf32>
    %25 = arith.addf %22, %24 : vector<2x128xf32>
    %cst_25 = arith.constant 0.000000e+00 : f32
    %26 = vector.broadcast %cst_25 : f32 to vector<2x128xf32>
    %27 = arith.maximumf %25, %26 : vector<2x128xf32>
    %c0_26 = arith.constant 0 : index
    %c0_27 = arith.constant 0 : index
    %28 = vector.load %arg4[%c0_26, %c0_27] : memref<128x128xf32, #tpu.memory_space<vmem>>, vector<128x128xf32>
    %cst_28 = arith.constant dense<0.000000e+00> : vector<2x128xf32>
    %29 = tpu.matmul %27, %28, %cst_28 {dimension_numbers = #tpu.dot_dimension_numbers<[1], [0], [0], [1], [0, 0, 1, 1], [], []>} : vector<2x128xf32>, vector<128x128xf32>, vector<2x128xf32> -> vector<2x128xf32>
    %c0_29 = arith.constant 0 : index
    %c0_30 = arith.constant 0 : index
    %30 = vector.load %arg5[%c0_29, %c0_30] : memref<1x128xf32, #tpu.memory_space<vmem>>, vector<1x128xf32>
    %31 = vector.broadcast %30 : vector<1x128xf32> to vector<2x128xf32>
    %32 = arith.addf %29, %31 : vector<2x128xf32>
    %cst_31 = arith.constant dense<0xFF800000> : vector<2xf32>
    %33 = vector.multi_reduction <maximumf>, %32, %cst_31 [1] : vector<2x128xf32> to vector<2xf32>
    %34 = vector.shape_cast %33 : vector<2xf32> to vector<2x1xf32>
    %35 = vector.broadcast %34 : vector<2x1xf32> to vector<2x128xf32>
    %36 = arith.subf %32, %35 : vector<2x128xf32>
    %37 = math.exp %36 : vector<2x128xf32>
    %cst_32 = arith.constant dense<0.000000e+00> : vector<2xf32>
    %38 = vector.multi_reduction <add>, %37, %cst_32 [1] : vector<2x128xf32> to vector<2xf32>
    %39 = vector.shape_cast %38 : vector<2xf32> to vector<2x1xf32>
    %40 = tpu.reciprocal %39 {approx = true} : vector<2x1xf32> -> vector<2x1xf32>
    %41 = vector.broadcast %40 : vector<2x1xf32> to vector<2x128xf32>
    %42 = arith.mulf %37, %41 : vector<2x128xf32>
    %c0_33 = arith.constant 0 : index
    %c0_34 = arith.constant 0 : index
    %43 = vector.load %arg6[%c0_33, %c0_34] : memref<2x128xf32, #tpu.memory_space<vmem>>, vector<2x128xf32>
    tpu.vector_store %arg6[%c0_33, %c0_34], %42 {strides = array<i32>} : memref<2x128xf32, #tpu.memory_space<vmem>>, vector<2x128xf32>,
    return
  }
  func.func @transform_0(%arg0: i32) -> (i32, i32, i32) {
    %c0_i32 = arith.constant 0 : i32
    %c0_i32_0 = arith.constant 0 : i32
    %c0_i32_1 = arith.constant 0 : i32
    return %c0_i32, %arg0, %c0_i32_0 : i32, i32, i32
  }
  func.func @transform_1(%arg0: i32) -> (i32, i32, i32) {
    %c0_i32 = arith.constant 0 : i32
    %c0_i32_0 = arith.constant 0 : i32
    %c0_i32_1 = arith.constant 0 : i32
    %c0_i32_2 = arith.constant 0 : i32
    return %c0_i32, %c0_i32_0, %c0_i32_1 : i32, i32, i32
  }
  func.func @transform_2(%arg0: i32) -> (i32, i32) {
    %c0_i32 = arith.constant 0 : i32
    %c0_i32_0 = arith.constant 0 : i32
    %c0_i32_1 = arith.constant 0 : i32
    return %c0_i32, %c0_i32_0 : i32, i32
  }
  func.func @transform_3(%arg0: i32) -> (i32, i32) {
    %c0_i32 = arith.constant 0 : i32
    %c0_i32_0 = arith.constant 0 : i32
    %c0_i32_1 = arith.constant 0 : i32
    return %c0_i32, %c0_i32_0 : i32, i32
  }
  func.func @transform_4(%arg0: i32) -> (i32, i32) {
    %c0_i32 = arith.constant 0 : i32
    %c0_i32_0 = arith.constant 0 : i32
    %c0_i32_1 = arith.constant 0 : i32
    return %c0_i32, %c0_i32_0 : i32, i32
  }
  func.func @transform_5(%arg0: i32) -> (i32, i32) {
    %c0_i32 = arith.constant 0 : i32
    %c0_i32_0 = arith.constant 0 : i32
    return %arg0, %c0_i32 : i32, i32
  }
}

</mosaic_0001>

<llo_original>
// kernel: tpu_custom_call.1
$region0: #{tpu_custom_call.1}
  #allocation0 [shape = 'u32[]', space=smem, size = 0x4, offset = 0x4, fixed_abs, tag = 'smem constant byte address 0x4 - core index']
  #allocation1 [shape = 'u32[144,128]{1,0:T(1,128)}', space=vmem, size = 0x12000, scoped, tag = 'internal scratch']
  %s0 = inlined_call_operand.hbm [shape: f32[4,2,8], index: 0, kind: input, shape index: {}]
  %s1 = inlined_call_operand.hbm [shape: f32[4,8,128], index: 1, kind: input, shape index: {}]
  %s2 = inlined_call_operand.vmem [shape: f32[1,128], index: 2, kind: input, shape index: {}]
  %s3 = inlined_call_operand.hbm [shape: f32[128,128], index: 3, kind: input, shape index: {}]
  %s4 = inlined_call_operand.vmem [shape: f32[1,128], index: 4, kind: input, shape index: {}]
  %s5 = inlined_call_operand.hbm [shape: f32[2,128], index: 5, kind: output, shape index: {}]
  %s6 = sld [smem:[#allocation0]]
  $region42: #{tpu_custom_call.1} parent=0
    _
  %s8 = ssub.s32 1, %s6
  %s9 = scalar_select 0, %s8, %s6
  $region1: #{tpu_custom_call.1} parent=0
    #allocation2 [shape = 'u8[4096]{0}', space=vmem, size = 0x1000, scoped, tag = 'input window, operand 0, single buffered']
    #allocation3 [shape = 's32[1]{0}', space=sflag, size = 0x4, scoped, tag = 'scoped memory for tpu_custom_call.1']
    #allocation4 [shape = 's32[1]{0}', space=sflag, size = 0x4, scoped, tag = 'scoped memory for tpu_custom_call.1']
    #allocation5 [shape = 'u8[16384]{0}', space=vmem, size = 0x4000, scoped, tag = 'input window, operand 1, single buffered']
    #allocation6 [shape = 's32[1]{0}', space=sflag, size = 0x4, scoped, tag = 'scoped memory for tpu_custom_call.1']
    #allocation7 [shape = 'u8[65536]{0}', space=vmem, size = 0x10000, scoped, tag = 'input window, operand 3, single buffered']
    #allocation8 [shape = 'u8[1024]{0}', space=vmem, size = 0x400, scoped, tag = 'output window, operand 0, single buffered']
    %10 = vsyncpa [#allocation3], 0
    %11 = vsyncpa [#allocation6], 0
    %12 = vsyncpa [#allocation4], 0
    // Predicated region
    $region2: #{tpu_custom_call.1} parent=1 // pred_check
      _
    $region3: #{tpu_custom_call.1} parent=1 // pred_check_branch
      %14 = sbr.rel (0) target = $region5
    $region4: #{tpu_custom_call.1} parent=1 // pred_region
      %s16 = ssub.s32 128, 128
      %17 = vsyncadd [#allocation3], %s16
      %s18 = sshll.u32 [#allocation2], 4
      %s19 = int_to_ptr.vmem [resolvable:$true] %s18
      %24 = dma.hbm_to_vmem [thread:$0]  %s0, 128, %s19, [#allocation3], 32, 32, 2
    $region5: #{tpu_custom_call.1} parent=1 // pred_fallthru
      _
    // Predicated region
    $region6: #{tpu_custom_call.1} parent=1 // pred_check
      _
    $region7: #{tpu_custom_call.1} parent=1 // pred_check_branch
      %26 = sbr.rel (0) target = $region9
    $region8: #{tpu_custom_call.1} parent=1 // pred_region
      %s28 = ssub.s32 512, 512
      %29 = vsyncadd [#allocation6], %s28
      %s30 = sshll.u32 [#allocation5], 4
      %s31 = int_to_ptr.vmem [resolvable:$true] %s30
      %36 = dma.hbm_to_vmem [thread:$0]  %s1, 512, %s31, [#allocation6], 128, 128, 8
    $region9: #{tpu_custom_call.1} parent=1 // pred_fallthru
      _
    // Predicated region
    $region10: #{tpu_custom_call.1} parent=1 // pred_check
      _
    $region11: #{tpu_custom_call.1} parent=1 // pred_check_branch
      %38 = sbr.rel (0) target = $region13
    $region12: #{tpu_custom_call.1} parent=1 // pred_region
      _
    $region13: #{tpu_custom_call.1} parent=1 // pred_fallthru
      _
    // Predicated region
    $region14: #{tpu_custom_call.1} parent=1 // pred_check
      _
    $region15: #{tpu_custom_call.1} parent=1 // pred_check_branch
      %40 = sbr.rel (0) target = $region17
    $region16: #{tpu_custom_call.1} parent=1 // pred_region
      %s42 = ssub.s32 2048, 2048
      %43 = vsyncadd [#allocation6], %s42
      %s44 = sshll.u32 [#allocation7], 4
      %s45 = int_to_ptr.vmem [resolvable:$true] %s44
      %50 = dma.hbm_to_vmem [thread:$0]  %s3, 2048, %s45, [#allocation6], 128, 128, 8
    $region17: #{tpu_custom_call.1} parent=1 // pred_fallthru
      _
    // Predicated region
    $region18: #{tpu_custom_call.1} parent=1 // pred_check
      _
    $region19: #{tpu_custom_call.1} parent=1 // pred_check_branch
      %52 = sbr.rel (0) target = $region21
    $region20: #{tpu_custom_call.1} parent=1 // pred_region
      _
    $region21: #{tpu_custom_call.1} parent=1 // pred_fallthru
      _
    // Predicated region
    $region22: #{tpu_custom_call.1} parent=1 // pred_check
      _
    $region23: #{tpu_custom_call.1} parent=1 // pred_check_branch
      %54 = sbr.rel (0) target = $region25
    $region24: #{tpu_custom_call.1} parent=1 // pred_region
      %55 = dma.done [#allocation3], 128
    $region25: #{tpu_custom_call.1} parent=1 // pred_fallthru
      _
    // Predicated region
    $region26: #{tpu_custom_call.1} parent=1 // pred_check
      _
    $region27: #{tpu_custom_call.1} parent=1 // pred_check_branch
      %57 = sbr.rel (0) target = $region29
    $region28: #{tpu_custom_call.1} parent=1 // pred_region
      %58 = dma.done [#allocation6], 512
    $region29: #{tpu_custom_call.1} parent=1 // pred_fallthru
      _
    // Predicated region
    $region30: #{tpu_custom_call.1} parent=1 // pred_check
      _
    $region31: #{tpu_custom_call.1} parent=1 // pred_check_branch
      %60 = sbr.rel (0) target = $region33
    $region32: #{tpu_custom_call.1} parent=1 // pred_region
      %61 = dma.done [#allocation6], 2048
    $region33: #{tpu_custom_call.1} parent=1 // pred_fallthru
      _
    %v62 = vld [vmem:[#allocation2] sm:$0x3]
    %v63 = vld [vmem:[#allocation5] sm:$0xff]
    %s64 = scalar_lea.vmem [#allocation2], 2
    %v65 = vld [vmem:[%s64] sm:$0x3]
    %s66 = scalar_lea.vmem [#allocation5], 8
    %v67 = vld [vmem:[%s66] sm:$0xff]
    %vm68 = vcmask 64512
    %v70 = vsel %vm68, %v65, 0
    %72 = vmatprep.subr.mxu0 0.0
    %73 = vmatpush1.msra.mxu0 0.0
    %74 = vmatprep.subr.mxu0 0.0
    %75 = vmatpush1.msra.mxu0 0.0
    %76 = vmatprep.subr.mxu0 0.0
    %77 = vmatpush1.msra.mxu0 0.0
    %78 = vmatprep.subr.mxu0 0.0
    %79 = vmatpush1.msra.mxu0 0.0
    %80 = vmatprep.subr.mxu0 0.0
    %81 = vmatpush1.msra.mxu0 0.0
    %82 = vmatprep.subr.mxu0 0.0
    %83 = vmatpush1.msra.mxu0 0.0
    %84 = vmatprep.subr.mxu0 0.0
    %85 = vmatpush1.msra.mxu0 0.0
    %86 = vmatprep.subr.mxu0 0.0
    %87 = vmatpush1.msra.mxu0 0.0
    %88 = vmatprep.subr.mxu0 0.0
    %89 = vmatpush1.msra.mxu0 0.0
    %90 = vmatprep.subr.mxu0 0.0
    %91 = vmatpush1.msra.mxu0 0.0
    %92 = vmatprep.subr.mxu0 0.0
    %93 = vmatpush1.msra.mxu0 0.0
    %94 = vmatprep.subr.mxu0 0.0
    %95 = vmatpush1.msra.mxu0 0.0
    %96 = vmatprep.subr.mxu0 0.0
    %97 = vmatpush1.msra.mxu0 0.0
    %98 = vmatprep.subr.mxu0 0.0
    %99 = vmatpush1.msra.mxu0 0.0
    %100 = vmatprep.subr.mxu0 0.0
    %101 = vmatpush1.msra.mxu0 0.0
    %102 = vmatprep.subr.mxu0 0.0
    %103 = vmatpush1.msra.mxu0 %v67
    %104 = vmatprep.subr.mxu0 0.0
    %105 = vmatpush2.msra.mxu0 0.0
    %106 = vmatprep.subr.mxu0 0.0
    %107 = vmatpush2.msra.mxu0 0.0
    %108 = vmatprep.subr.mxu0 0.0
    %109 = vmatpush2.msra.mxu0 0.0
    %110 = vmatprep.subr.mxu0 0.0
    %111 = vmatpush2.msra.mxu0 0.0
    %112 = vmatprep.subr.mxu0 0.0
    %113 = vmatpush2.msra.mxu0 0.0
    %114 = vmatprep.subr.mxu0 0.0
    %115 = vmatpush2.msra.mxu0 0.0
    %116 = vmatprep.subr.mxu0 0.0
    %117 = vmatpush2.msra.mxu0 0.0
    %118 = vmatprep.subr.mxu0 0.0
    %119 = vmatpush2.msra.mxu0 0.0
    %120 = vmatprep.subr.mxu0 0.0
    %121 = vmatpush2.msra.mxu0 0.0
    %122 = vmatprep.subr.mxu0 0.0
    %123 = vmatpush2.msra.mxu0 0.0
    %124 = vmatprep.subr.mxu0 0.0
    %125 = vmatpush2.msra.mxu0 0.0
    %126 = vmatprep.subr.mxu0 0.0
    %127 = vmatpush2.msra.mxu0 0.0
    %128 = vmatprep.subr.mxu0 0.0
    %129 = vmatpush2.msra.mxu0 0.0
    %130 = vmatprep.subr.mxu0 0.0
    %131 = vmatpush2.msra.mxu0 0.0
    %132 = vmatprep.subr.mxu0 0.0
    %133 = vmatpush2.msra.mxu0 0.0
    %134 = vmatprep.subr.mxu0 0.0
    %135 = vmatpush2.msra.mxu0 0.0
    %136 = vmatprep.mubr.f32.mxu0 0.0
    %137 = vmatmul.mubr.f32.gmra.mxu0 %v70
    %v138 = vpop.f32.mrf.mxu0
    %v139 = vadd.f32 0.0, %v138
    %v140 = vpop.f32.mrf.mxu0
    %141 = vdwg.mxu0
    %v143 = vsel %vm68, %v62, 0
    %145 = vmatprep.subr.mxu0 0.0
    %146 = vmatpush1.msra.mxu0 0.0
    %147 = vmatprep.subr.mxu0 0.0
    %148 = vmatpush1.msra.mxu0 0.0
    %149 = vmatprep.subr.mxu0 0.0
    %150 = vmatpush1.msra.mxu0 0.0
    %151 = vmatprep.subr.mxu0 0.0
    %152 = vmatpush1.msra.mxu0 0.0
    %153 = vmatprep.subr.mxu0 0.0
    %154 = vmatpush1.msra.mxu0 0.0
    %155 = vmatprep.subr.mxu0 0.0
    %156 = vmatpush1.msra.mxu0 0.0
    %157 = vmatprep.subr.mxu0 0.0
    %158 = vmatpush1.msra.mxu0 0.0
    %159 = vmatprep.subr.mxu0 0.0
    %160 = vmatpush1.msra.mxu0 0.0
    %161 = vmatprep.subr.mxu0 0.0
    %162 = vmatpush1.msra.mxu0 0.0
    %163 = vmatprep.subr.mxu0 0.0
    %164 = vmatpush1.msra.mxu0 0.0
    %165 = vmatprep.subr.mxu0 0.0
    %166 = vmatpush1.msra.mxu0 0.0
    %167 = vmatprep.subr.mxu0 0.0
    %168 = vmatpush1.msra.mxu0 0.0
    %169 = vmatprep.subr.mxu0 0.0
    %170 = vmatpush1.msra.mxu0 0.0
    %171 = vmatprep.subr.mxu0 0.0
    %172 = vmatpush1.msra.mxu0 0.0
    %173 = vmatprep.subr.mxu0 0.0
    %174 = vmatpush1.msra.mxu0 0.0
    %175 = vmatprep.subr.mxu0 0.0
    %176 = vmatpush1.msra.mxu0 %v63
    %177 = vmatprep.subr.mxu0 0.0
    %178 = vmatpush2.msra.mxu0 0.0
    %179 = vmatprep.subr.mxu0 0.0
    %180 = vmatpush2.msra.mxu0 0.0
    %181 = vmatprep.subr.mxu0 0.0
    %182 = vmatpush2.msra.mxu0 0.0
    %183 = vmatprep.subr.mxu0 0.0
    %184 = vmatpush2.msra.mxu0 0.0
    %185 = vmatprep.subr.mxu0 0.0
    %186 = vmatpush2.msra.mxu0 0.0
    %187 = vmatprep.subr.mxu0 0.0
    %188 = vmatpush2.msra.mxu0 0.0
    %189 = vmatprep.subr.mxu0 0.0
    %190 = vmatpush2.msra.mxu0 0.0
    %191 = vmatprep.subr.mxu0 0.0
    %192 = vmatpush2.msra.mxu0 0.0
    %193 = vmatprep.subr.mxu0 0.0
    %194 = vmatpush2.msra.mxu0 0.0
    %195 = vmatprep.subr.mxu0 0.0
    %196 = vmatpush2.msra.mxu0 0.0
    %197 = vmatprep.subr.mxu0 0.0
    %198 = vmatpush2.msra.mxu0 0.0
    %199 = vmatprep.subr.mxu0 0.0
    %200 = vmatpush2.msra.mxu0 0.0
    %201 = vmatprep.subr.mxu0 0.0
    %202 = vmatpush2.msra.mxu0 0.0
    %203 = vmatprep.subr.mxu0 0.0
    %204 = vmatpush2.msra.mxu0 0.0
    %205 = vmatprep.subr.mxu0 0.0
    %206 = vmatpush2.msra.mxu0 0.0
    %207 = vmatprep.subr.mxu0 0.0
    %208 = vmatpush2.msra.mxu0 0.0
    %209 = vmatprep.mubr.f32.mxu0 0.0
    %210 = vmatmul.mubr.f32.gmra.mxu0 %v143
    %v211 = vpop.f32.mrf.mxu0
    %v212 = vadd.f32 %v139, %v211
    %v213 = vpop.f32.mrf.mxu0
    %214 = vdwg.mxu0
    %s215 = scalar_lea.vmem [#allocation2], 4
    %v216 = vld [vmem:[%s215] sm:$0x3]
    %s217 = scalar_lea.vmem [#allocation5], 16
    %v218 = vld [vmem:[%s217] sm:$0xff]
    %v220 = vsel %vm68, %v216, 0
    %222 = vmatprep.subr.mxu0 0.0
    %223 = vmatpush1.msra.mxu0 0.0
    %224 = vmatprep.subr.mxu0 0.0
    %225 = vmatpush1.msra.mxu0 0.0
    %226 = vmatprep.subr.mxu0 0.0
    %227 = vmatpush1.msra.mxu0 0.0
    %228 = vmatprep.subr.mxu0 0.0
    %229 = vmatpush1.msra.mxu0 0.0
    %230 = vmatprep.subr.mxu0 0.0
    %231 = vmatpush1.msra.mxu0 0.0
    %232 = vmatprep.subr.mxu0 0.0
    %233 = vmatpush1.msra.mxu0 0.0
    %234 = vmatprep.subr.mxu0 0.0
    %235 = vmatpush1.msra.mxu0 0.0
    %236 = vmatprep.subr.mxu0 0.0
    %237 = vmatpush1.msra.mxu0 0.0
    %238 = vmatprep.subr.mxu0 0.0
    %239 = vmatpush1.msra.mxu0 0.0
    %240 = vmatprep.subr.mxu0 0.0
    %241 = vmatpush1.msra.mxu0 0.0
    %242 = vmatprep.subr.mxu0 0.0
    %243 = vmatpush1.msra.mxu0 0.0
    %244 = vmatprep.subr.mxu0 0.0
    %245 = vmatpush1.msra.mxu0 0.0
    %246 = vmatprep.subr.mxu0 0.0
    %247 = vmatpush1.msra.mxu0 0.0
    %248 = vmatprep.subr.mxu0 0.0
    %249 = vmatpush1.msra.mxu0 0.0
    %250 = vmatprep.subr.mxu0 0.0
    %251 = vmatpush1.msra.mxu0 0.0
    %252 = vmatprep.subr.mxu0 0.0
    %253 = vmatpush1.msra.mxu0 %v218
    %254 = vmatprep.subr.mxu0 0.0
    %255 = vmatpush2.msra.mxu0 0.0
    %256 = vmatprep.subr.mxu0 0.0
    %257 = vmatpush2.msra.mxu0 0.0
    %258 = vmatprep.subr.mxu0 0.0
    %259 = vmatpush2.msra.mxu0 0.0
    %260 = vmatprep.subr.mxu0 0.0
    %261 = vmatpush2.msra.mxu0 0.0
    %262 = vmatprep.subr.mxu0 0.0
    %263 = vmatpush2.msra.mxu0 0.0
    %264 = vmatprep.subr.mxu0 0.0
    %265 = vmatpush2.msra.mxu0 0.0
    %266 = vmatprep.subr.mxu0 0.0
    %267 = vmatpush2.msra.mxu0 0.0
    %268 = vmatprep.subr.mxu0 0.0
    %269 = vmatpush2.msra.mxu0 0.0
    %270 = vmatprep.subr.mxu0 0.0
    %271 = vmatpush2.msra.mxu0 0.0
    %272 = vmatprep.subr.mxu0 0.0
    %273 = vmatpush2.msra.mxu0 0.0
    %274 = vmatprep.subr.mxu0 0.0
    %275 = vmatpush2.msra.mxu0 0.0
    %276 = vmatprep.subr.mxu0 0.0
    %277 = vmatpush2.msra.mxu0 0.0
    %278 = vmatprep.subr.mxu0 0.0
    %279 = vmatpush2.msra.mxu0 0.0
    %280 = vmatprep.subr.mxu0 0.0
    %281 = vmatpush2.msra.mxu0 0.0
    %282 = vmatprep.subr.mxu0 0.0
    %283 = vmatpush2.msra.mxu0 0.0
    %284 = vmatprep.subr.mxu0 0.0
    %285 = vmatpush2.msra.mxu0 0.0
    %286 = vmatprep.mubr.f32.mxu0 0.0
    %287 = vmatmul.mubr.f32.gmra.mxu0 %v220
    %v288 = vpop.f32.mrf.mxu0
    %v289 = vadd.f32 0.0, %v288
    %v290 = vpop.f32.mrf.mxu0
    %291 = vdwg.mxu0
    %v292 = vadd.f32 %v212, %v289
    %s293 = scalar_lea.vmem [#allocation2], 6
    %v294 = vld [vmem:[%s293] sm:$0x3]
    %s295 = scalar_lea.vmem [#allocation5], 24
    %v296 = vld [vmem:[%s295] sm:$0xff]
    %v298 = vsel %vm68, %v294, 0
    %300 = vmatprep.subr.mxu0 0.0
    %301 = vmatpush1.msra.mxu0 0.0
    %302 = vmatprep.subr.mxu0 0.0
    %303 = vmatpush1.msra.mxu0 0.0
    %304 = vmatprep.subr.mxu0 0.0
    %305 = vmatpush1.msra.mxu0 0.0
    %306 = vmatprep.subr.mxu0 0.0
    %307 = vmatpush1.msra.mxu0 0.0
    %308 = vmatprep.subr.mxu0 0.0
    %309 = vmatpush1.msra.mxu0 0.0
    %310 = vmatprep.subr.mxu0 0.0
    %311 = vmatpush1.msra.mxu0 0.0
    %312 = vmatprep.subr.mxu0 0.0
    %313 = vmatpush1.msra.mxu0 0.0
    %314 = vmatprep.subr.mxu0 0.0
    %315 = vmatpush1.msra.mxu0 0.0
    %316 = vmatprep.subr.mxu0 0.0
    %317 = vmatpush1.msra.mxu0 0.0
    %318 = vmatprep.subr.mxu0 0.0
    %319 = vmatpush1.msra.mxu0 0.0
    %320 = vmatprep.subr.mxu0 0.0
    %321 = vmatpush1.msra.mxu0 0.0
    %322 = vmatprep.subr.mxu0 0.0
    %323 = vmatpush1.msra.mxu0 0.0
    %324 = vmatprep.subr.mxu0 0.0
    %325 = vmatpush1.msra.mxu0 0.0
    %326 = vmatprep.subr.mxu0 0.0
    %327 = vmatpush1.msra.mxu0 0.0
    %328 = vmatprep.subr.mxu0 0.0
    %329 = vmatpush1.msra.mxu0 0.0
    %330 = vmatprep.subr.mxu0 0.0
    %331 = vmatpush1.msra.mxu0 %v296
    %332 = vmatprep.subr.mxu0 0.0
    %333 = vmatpush2.msra.mxu0 0.0
    %334 = vmatprep.subr.mxu0 0.0
    %335 = vmatpush2.msra.mxu0 0.0
    %336 = vmatprep.subr.mxu0 0.0
    %337 = vmatpush2.msra.mxu0 0.0
    %338 = vmatprep.subr.mxu0 0.0
    %339 = vmatpush2.msra.mxu0 0.0
    %340 = vmatprep.subr.mxu0 0.0
    %341 = vmatpush2.msra.mxu0 0.0
    %342 = vmatprep.subr.mxu0 0.0
    %343 = vmatpush2.msra.mxu0 0.0
    %344 = vmatprep.subr.mxu0 0.0
    %345 = vmatpush2.msra.mxu0 0.0
    %346 = vmatprep.subr.mxu0 0.0
    %347 = vmatpush2.msra.mxu0 0.0
    %348 = vmatprep.subr.mxu0 0.0
    %349 = vmatpush2.msra.mxu0 0.0
    %350 = vmatprep.subr.mxu0 0.0
    %351 = vmatpush2.msra.mxu0 0.0
    %352 = vmatprep.subr.mxu0 0.0
    %353 = vmatpush2.msra.mxu0 0.0
    %354 = vmatprep.subr.mxu0 0.0
    %355 = vmatpush2.msra.mxu0 0.0
    %356 = vmatprep.subr.mxu0 0.0
    %357 = vmatpush2.msra.mxu0 0.0
    %358 = vmatprep.subr.mxu0 0.0
    %359 = vmatpush2.msra.mxu0 0.0
    %360 = vmatprep.subr.mxu0 0.0
    %361 = vmatpush2.msra.mxu0 0.0
    %362 = vmatprep.subr.mxu0 0.0
    %363 = vmatpush2.msra.mxu0 0.0
    %364 = vmatprep.mubr.f32.mxu0 0.0
    %365 = vmatmul.mubr.f32.gmra.mxu0 %v298
    %v366 = vpop.f32.mrf.mxu0
    %v367 = vadd.f32 0.0, %v366
    %v368 = vpop.f32.mrf.mxu0
    %369 = vdwg.mxu0
    %v370 = vadd.f32 %v292, %v367
    %v371 = vld [vmem:[%s2] sm:$0x1]
    %v373 = vlaneseq
    %v374 = vshrl.u32 %v373, 7
    %v375 = vsub.s32 0, %v374
    %v376 = vrot.slane %v371, %v375
    %v378 = vadd.f32 %v370, %v376
    %v379 = vmax.f32 %v378, 0.0
    %v380 = vld [vmem:[#allocation7] sm:$0xff]
    %v381 = vld [vmem:[#allocation7 + $0x8] sm:$0xff]
    %v382 = vld [vmem:[#allocation7 + $0x10] sm:$0xff]
    %v383 = vld [vmem:[#allocation7 + $0x18] sm:$0xff]
    %v384 = vld [vmem:[#allocation7 + $0x20] sm:$0xff]
    %v385 = vld [vmem:[#allocation7 + $0x28] sm:$0xff]
    %v386 = vld [vmem:[#allocation7 + $0x30] sm:$0xff]
    %v387 = vld [vmem:[#allocation7 + $0x38] sm:$0xff]
    %v388 = vld [vmem:[#allocation7 + $0x40] sm:$0xff]
    %v389 = vld [vmem:[#allocation7 + $0x48] sm:$0xff]
    %v390 = vld [vmem:[#allocation7 + $0x50] sm:$0xff]
    %v391 = vld [vmem:[#allocation7 + $0x58] sm:$0xff]
    %v392 = vld [vmem:[#allocation7 + $0x60] sm:$0xff]
    %v393 = vld [vmem:[#allocation7 + $0x68] sm:$0xff]
    %v394 = vld [vmem:[#allocation7 + $0x70] sm:$0xff]
    %v395 = vld [vmem:[#allocation7 + $0x78] sm:$0xff]
    %v396 = vld [vmem:[%s4] sm:$0x1]
    %v398 = vlaneseq
    %v399 = vshrl.u32 %v398, 7
    %v400 = vsub.s32 0, %v399
    %v401 = vrot.slane %v396, %v400
    %403 = vmatprep.subr.mxu0 0.0
    %404 = vmatpush1.msra.mxu0 %v395
    %405 = vmatprep.subr.mxu0 0.0
    %406 = vmatpush1.msra.mxu0 %v394
    %407 = vmatprep.subr.mxu0 0.0
    %408 = vmatpush1.msra.mxu0 %v393
    %409 = vmatprep.subr.mxu0 0.0
    %410 = vmatpush1.msra.mxu0 %v392
    %411 = vmatprep.subr.mxu0 0.0
    %412 = vmatpush1.msra.mxu0 %v391
    %413 = vmatprep.subr.mxu0 0.0
    %414 = vmatpush1.msra.mxu0 %v390
    %415 = vmatprep.subr.mxu0 0.0
    %416 = vmatpush1.msra.mxu0 %v389
    %417 = vmatprep.subr.mxu0 0.0
    %418 = vmatpush1.msra.mxu0 %v388
    %419 = vmatprep.subr.mxu0 0.0
    %420 = vmatpush1.msra.mxu0 %v387
    %421 = vmatprep.subr.mxu0 0.0
    %422 = vmatpush1.msra.mxu0 %v386
    %423 = vmatprep.subr.mxu0 0.0
    %424 = vmatpush1.msra.mxu0 %v385
    %425 = vmatprep.subr.mxu0 0.0
    %426 = vmatpush1.msra.mxu0 %v384
    %427 = vmatprep.subr.mxu0 0.0
    %428 = vmatpush1.msra.mxu0 %v383
    %429 = vmatprep.subr.mxu0 0.0
    %430 = vmatpush1.msra.mxu0 %v382
    %431 = vmatprep.subr.mxu0 0.0
    %432 = vmatpush1.msra.mxu0 %v381
    %433 = vmatprep.subr.mxu0 0.0
    %434 = vmatpush1.msra.mxu0 %v380
    %435 = vmatprep.subr.mxu0 0.0
    %436 = vmatpush2.msra.mxu0 0.0
    %437 = vmatprep.subr.mxu0 0.0
    %438 = vmatpush2.msra.mxu0 0.0
    %439 = vmatprep.subr.mxu0 0.0
    %440 = vmatpush2.msra.mxu0 0.0
    %441 = vmatprep.subr.mxu0 0.0
    %442 = vmatpush2.msra.mxu0 0.0
    %443 = vmatprep.subr.mxu0 0.0
    %444 = vmatpush2.msra.mxu0 0.0
    %445 = vmatprep.subr.mxu0 0.0
    %446 = vmatpush2.msra.mxu0 0.0
    %447 = vmatprep.subr.mxu0 0.0
    %448 = vmatpush2.msra.mxu0 0.0
    %449 = vmatprep.subr.mxu0 0.0
    %450 = vmatpush2.msra.mxu0 0.0
    %451 = vmatprep.subr.mxu0 0.0
    %452 = vmatpush2.msra.mxu0 0.0
    %453 = vmatprep.subr.mxu0 0.0
    %454 = vmatpush2.msra.mxu0 0.0
    %455 = vmatprep.subr.mxu0 0.0
    %456 = vmatpush2.msra.mxu0 0.0
    %457 = vmatprep.subr.mxu0 0.0
    %458 = vmatpush2.msra.mxu0 0.0
    %459 = vmatprep.subr.mxu0 0.0
    %460 = vmatpush2.msra.mxu0 0.0
    %461 = vmatprep.subr.mxu0 0.0
    %462 = vmatpush2.msra.mxu0 0.0
    %463 = vmatprep.subr.mxu0 0.0
    %464 = vmatpush2.msra.mxu0 0.0
    %465 = vmatprep.subr.mxu0 0.0
    %466 = vmatpush2.msra.mxu0 0.0
    %467 = vmatprep.mubr.f32.mxu0 0.0
    %468 = vmatmul.mubr.f32.gmra.mxu0 %v379
    %v469 = vpop.f32.mrf.mxu0
    %v470 = vadd.f32 %v401, %v469
    %v471 = vpop.f32.mrf.mxu0
    %472 = vdwg.mxu0
    %vm473 = vcmask 1041408
    %v474 = vsel %vm473, %v470, -inf
    %475 = vmax.xlane.f32.xlu0 %v474
    %v476 = vpop.xlane.xlu0 %475
    %v477 = vsub.f32 %v470, %v476
    %v478 = vmul.f32 %v477, 1.442695
    %v479 = vpow.pop %v478
    %v480 = vsel %vm473, %v479, 0.0
    %481 = vadd.xlane.f32.xlu0 %v480
    %v482 = vpop.xlane.xlu0 %481
    %v483 = vrcp.pop %v482
    %v484 = vmul.f32 %v479, %v483
    %485 = vst [vmem:[#allocation8] sm:$0x3] %v484
    // Predicated region
    $region34: #{tpu_custom_call.1} parent=1 // pred_check
      _
    $region35: #{tpu_custom_call.1} parent=1 // pred_check_branch
      %487 = sbr.rel (0) target = $region37
    $region36: #{tpu_custom_call.1} parent=1 // pred_region
      %s489 = ssub.s32 32, 32
      %490 = vsyncadd [#allocation4], %s489
      %s492 = sshll.u32 [#allocation8], 4
      %s493 = int_to_ptr.vmem [resolvable:$true] %s492
      %495 = dma.vmem_to_hbm [thread:$0]  %s493, 32, %s5, [#allocation4]
    $region37: #{tpu_custom_call.1} parent=1 // pred_fallthru
      _
    // Predicated region
    $region38: #{tpu_custom_call.1} parent=1 // pred_check
      _
    $region39: #{tpu_custom_call.1} parent=1 // pred_check_branch
      %497 = sbr.rel (0) target = $region41
    $region40: #{tpu_custom_call.1} parent=1 // pred_region
      %498 = dma.done [#allocation4], 32
    $region41: #{tpu_custom_call.1} parent=1 // pred_fallthru
      _
    %499 = vsyncpa [#allocation3], 1
    %500 = vsyncpa [#allocation6], 1
    %501 = vsyncpa [#allocation4], 1

</llo_original>
